<compile_context>
chip_gen: v7x
topology: tpu7x:2x2x1
jax: 0.10.0
libtpu: 0.0.40
codegen_flags: <defaults>
</compile_context>

<pallas_src>
import math

import jax
import jax.numpy as jnp
from jax.experimental import pallas as pl
from jax.experimental.pallas import tpu as pltpu


def _gmu_kernel(x1_ref, x2_ref, w1_ref, w2_ref, wz1_ref, wz2_ref, aff_ref,
                o_ref):
    x1 = x1_ref[...].astype(jnp.float32)                        # (tm, in1)
    x2 = x2_ref[...].astype(jnp.float32)                        # (tm, in2)

    # MXU matmuls with f32 accumulation, tanh on the EUP.
    h1 = jnp.tanh(jnp.dot(x1, w1_ref[...],
                          preferred_element_type=jnp.float32))  # (tm, out)
    h2 = jnp.tanh(jnp.dot(x2, w2_ref[...],
                          preferred_element_type=jnp.float32))  # (tm, out)

    # Packed affine params: rows = [scale1, bias1, scale2, bias2].
    s1 = aff_ref[0:1, :]
    b1 = aff_ref[1:2, :]
    s2 = aff_ref[2:3, :]
    b2 = aff_ref[3:4, :]
    h1t = s1 * h1 + b1                                          # (tm, out)
    h2t = s2 * h2 + b2

    # Gate: sigmoid(cat(x1, x2) @ Wz.T) == sigmoid(x1 @ Wz1.T + x2 @ Wz2.T),
    # done as a lane reduction instead of a 1-wide matmul.
    z_logit = (jnp.sum(x1 * wz1_ref[...], axis=-1, keepdims=True)
               + jnp.sum(x2 * wz2_ref[...], axis=-1, keepdims=True))  # (tm, 1)
    z = jax.nn.sigmoid(z_logit)

    o_ref[...] = (z * h1t + (1.0 - z) * h2t).astype(o_ref.dtype)


def gated_multimodal_layer(x1, x2, w1, w2, wz, scale1, bias1, scale2, bias2,
                           *, block_rows=512):
    """x1: [..., size_in1], x2: [..., size_in2].  Weights in PyTorch layout:
    w1: [size_out, size_in1], w2: [size_out, size_in2],
    wz: [1, size_in1 + size_in2]."""
    size_in1 = x1.shape[-1]
    size_in2 = x2.shape[-1]
    size_out = w1.shape[0]
    assert w1.shape == (size_out, size_in1)
    assert w2.shape == (size_out, size_in2)
    # The PyTorch module only runs when size_in1 + size_in2 == 2 * size_out.
    assert wz.shape == (1, size_in1 + size_in2)
    assert x1.shape[:-1] == x2.shape[:-1]

    lead = x1.shape[:-1]
    M = math.prod(lead) if lead else 1
    x1_2d = x1.reshape(M, size_in1)
    x2_2d = x2.reshape(M, size_in2)

    # One-time parameter relayout on the wrapper side (tiny tensors).
    w1_t = jnp.asarray(w1, jnp.float32).T                        # [in1, out]
    w2_t = jnp.asarray(w2, jnp.float32).T                        # [in2, out]
    wz1 = jnp.asarray(wz[:, :size_in1], jnp.float32)             # [1, in1]
    wz2 = jnp.asarray(wz[:, size_in1:], jnp.float32)             # [1, in2]
    aff = jnp.stack([
        jnp.asarray(scale1, jnp.float32).reshape(size_out),
        jnp.asarray(bias1, jnp.float32).reshape(size_out),
        jnp.asarray(scale2, jnp.float32).reshape(size_out),
        jnp.asarray(bias2, jnp.float32).reshape(size_out),
    ], axis=0)                                                   # [4, out]

    # Row tile: full extent when M is small, otherwise an 8-aligned block.
    tm = M if M <= block_rows else block_rows
    grid = (pl.cdiv(M, tm),)

    row_map = lambda i: (i, 0)
    const_map = lambda i: (0, 0)

    out_2d = pl.pallas_call(
        _gmu_kernel,
        out_shape=jax.ShapeDtypeStruct((M, size_out), x1.dtype),
        grid_spec=pl.GridSpec(
            grid=grid,
            in_specs=[
                pl.BlockSpec((tm, size_in1), row_map),           # x1 rows
                pl.BlockSpec((tm, size_in2), row_map),           # x2 rows
                pl.BlockSpec((size_in1, size_out), const_map),   # W1.T (resident)
                pl.BlockSpec((size_in2, size_out), const_map),   # W2.T (resident)
                pl.BlockSpec((1, size_in1), const_map),          # Wz half 1
                pl.BlockSpec((1, size_in2), const_map),          # Wz half 2
                pl.BlockSpec((4, size_out), const_map),          # scale/bias pack
            ],
            out_specs=pl.BlockSpec((tm, size_out), row_map),
        ),
        compiler_params=pltpu.CompilerParams(
            dimension_semantics=("parallel",),
        ),
    )(x1_2d, x2_2d, w1_t, w2_t, wz1, wz2, aff)

    return out_2d.reshape(*lead, size_out)


def _reference(x1, x2, w1, w2, wz, scale1, bias1, scale2, bias2):
    x1 = x1.astype(jnp.float32)
    x2 = x2.astype(jnp.float32)
    h1 = jnp.tanh(x1 @ w1.T)
    h2 = jnp.tanh(x2 @ w2.T)
    h1t = scale1 * h1 + bias1
    h2t = scale2 * h2 + bias2
    x = jnp.concatenate([x1, x2], axis=-1)
    z = jax.nn.sigmoid(x @ wz.T)
    return z * h1t + (1.0 - z) * h2t


if __name__ == "__main__":
    # GatedMultimodalLayer(size_in1=32, size_in2=32, size_out=32)
    # (the PyTorch forward requires size_in1 + size_in2 == 2 * size_out).
    B, S = 2, 8
    size_in1, size_in2, size_out = 32, 32, 32

    key = jax.random.PRNGKey(0)
    k1, k2, k3, k4, k5 = jax.random.split(key, 5)
    x1 = jax.random.normal(k1, (B, S, size_in1), dtype=jnp.float32)
    x2 = jax.random.normal(k2, (B, S, size_in2), dtype=jnp.float32)

    # Linear weights in PyTorch layout [out_features, in_features], bias=False.
    w1 = jax.random.normal(k3, (size_out, size_in1), jnp.float32) / jnp.sqrt(size_in1)
    w2 = jax.random.normal(k4, (size_out, size_in2), jnp.float32) / jnp.sqrt(size_in2)
    wz = jax.random.normal(k5, (1, 2 * size_out), jnp.float32) / jnp.sqrt(2.0 * size_out)

    # Parameter init matching __init__: scale=ones, bias=zeros.
    scale1 = jnp.ones((size_out,), jnp.float32)
    bias1 = jnp.zeros((size_out,), jnp.float32)
    scale2 = jnp.ones((size_out,), jnp.float32)
    bias2 = jnp.zeros((size_out,), jnp.float32)

    out = gated_multimodal_layer(x1, x2, w1, w2, wz, scale1, bias1, scale2, bias2)
    out = jax.block_until_ready(out)

    ref = _reference(x1, x2, w1, w2, wz, scale1, bias1, scale2, bias2)
    assert out.shape == (B, S, size_out)
    assert jnp.allclose(out, ref, atol=1e-4, rtol=1e-4)

    print("KERNEL_OK")
</pallas_src>

<mosaic_0001>
module attributes {stable_mosaic.version = 11 : i64} {
  func.func @_gmu_kernel(%arg0: i32, %arg1: memref<16x32xf32, #tpu.memory_space<vmem>>, %arg2: memref<16x32xf32, #tpu.memory_space<vmem>>, %arg3: memref<32x32xf32, #tpu.memory_space<vmem>>, %arg4: memref<32x32xf32, #tpu.memory_space<vmem>>, %arg5: memref<1x32xf32, #tpu.memory_space<vmem>>, %arg6: memref<1x32xf32, #tpu.memory_space<vmem>>, %arg7: memref<4x32xf32, #tpu.memory_space<vmem>>, %arg8: memref<16x32xf32, #tpu.memory_space<vmem>>) attributes {dimension_semantics = [#tpu.dimension_semantics<parallel>], iteration_bounds = array<i64: 1>, scalar_prefetch = 0 : i64, scratch_operands = 0 : i64, tpu.core_type = #tpu.core_type<tc>, window_params = [{transform_indices = @transform_0, window_bounds = array<i64: 16, 32>}, {transform_indices = @transform_1, window_bounds = array<i64: 16, 32>}, {pipeline_mode = #tpu.pipeline_mode<synchronous>, transform_indices = @transform_2, window_bounds = array<i64: 32, 32>}, {pipeline_mode = #tpu.pipeline_mode<synchronous>, transform_indices = @transform_3, window_bounds = array<i64: 32, 32>}, {pipeline_mode = #tpu.pipeline_mode<synchronous>, transform_indices = @transform_4, window_bounds = array<i64: 1, 32>}, {pipeline_mode = #tpu.pipeline_mode<synchronous>, transform_indices = @transform_5, window_bounds = array<i64: 1, 32>}, {pipeline_mode = #tpu.pipeline_mode<synchronous>, transform_indices = @transform_6, window_bounds = array<i64: 4, 32>}, {transform_indices = @transform_7, window_bounds = array<i64: 16, 32>}]} {
    %c0 = arith.constant 0 : index
    %c0_0 = arith.constant 0 : index
    %0 = vector.load %arg1[%c0, %c0_0] : memref<16x32xf32, #tpu.memory_space<vmem>>, vector<16x32xf32>
    %c0_1 = arith.constant 0 : index
    %c0_2 = arith.constant 0 : index
    %1 = vector.load %arg2[%c0_1, %c0_2] : memref<16x32xf32, #tpu.memory_space<vmem>>, vector<16x32xf32>
    %c0_3 = arith.constant 0 : index
    %c0_4 = arith.constant 0 : index
    %2 = vector.load %arg3[%c0_3, %c0_4] : memref<32x32xf32, #tpu.memory_space<vmem>>, vector<32x32xf32>
    %cst = arith.constant dense<0.000000e+00> : vector<16x32xf32>
    %3 = tpu.matmul %0, %2, %cst {dimension_numbers = #tpu.dot_dimension_numbers<[1], [0], [0], [1], [0, 0, 1, 1], [], []>} : vector<16x32xf32>, vector<32x32xf32>, vector<16x32xf32> -> vector<16x32xf32>
    %4 = math.tanh %3 : vector<16x32xf32>
    %c0_5 = arith.constant 0 : index
    %c0_6 = arith.constant 0 : index
    %5 = vector.load %arg4[%c0_5, %c0_6] : memref<32x32xf32, #tpu.memory_space<vmem>>, vector<32x32xf32>
    %cst_7 = arith.constant dense<0.000000e+00> : vector<16x32xf32>
    %6 = tpu.matmul %1, %5, %cst_7 {dimension_numbers = #tpu.dot_dimension_numbers<[1], [0], [0], [1], [0, 0, 1, 1], [], []>} : vector<16x32xf32>, vector<32x32xf32>, vector<16x32xf32> -> vector<16x32xf32>
    %7 = math.tanh %6 : vector<16x32xf32>
    %c0_8 = arith.constant 0 : index
    %c0_9 = arith.constant 0 : index
    %8 = vector.load %arg7[%c0_8, %c0_9] : memref<4x32xf32, #tpu.memory_space<vmem>>, vector<1x32xf32>
    %c1 = arith.constant 1 : index
    %c0_10 = arith.constant 0 : index
    %9 = vector.load %arg7[%c1, %c0_10] : memref<4x32xf32, #tpu.memory_space<vmem>>, vector<1x32xf32>
    %c2 = arith.constant 2 : index
    %c0_11 = arith.constant 0 : index
    %10 = vector.load %arg7[%c2, %c0_11] : memref<4x32xf32, #tpu.memory_space<vmem>>, vector<1x32xf32>
    %c3 = arith.constant 3 : index
    %c0_12 = arith.constant 0 : index
    %11 = vector.load %arg7[%c3, %c0_12] : memref<4x32xf32, #tpu.memory_space<vmem>>, vector<1x32xf32>
    %12 = vector.broadcast %8 : vector<1x32xf32> to vector<16x32xf32>
    %13 = arith.mulf %12, %4 : vector<16x32xf32>
    %14 = vector.broadcast %9 : vector<1x32xf32> to vector<16x32xf32>
    %15 = arith.addf %13, %14 : vector<16x32xf32>
    %16 = vector.broadcast %10 : vector<1x32xf32> to vector<16x32xf32>
    %17 = arith.mulf %16, %7 : vector<16x32xf32>
    %18 = vector.broadcast %11 : vector<1x32xf32> to vector<16x32xf32>
    %19 = arith.addf %17, %18 : vector<16x32xf32>
    %c0_13 = arith.constant 0 : index
    %c0_14 = arith.constant 0 : index
    %20 = vector.load %arg5[%c0_13, %c0_14] : memref<1x32xf32, #tpu.memory_space<vmem>>, vector<1x32xf32>
    %21 = vector.broadcast %20 : vector<1x32xf32> to vector<16x32xf32>
    %22 = arith.mulf %0, %21 : vector<16x32xf32>
    %cst_15 = arith.constant dense<0.000000e+00> : vector<16xf32>
    %23 = vector.multi_reduction <add>, %22, %cst_15 [1] : vector<16x32xf32> to vector<16xf32>
    %24 = vector.shape_cast %23 : vector<16xf32> to vector<16x1xf32>
    %c0_16 = arith.constant 0 : index
    %c0_17 = arith.constant 0 : index
    %25 = vector.load %arg6[%c0_16, %c0_17] : memref<1x32xf32, #tpu.memory_space<vmem>>, vector<1x32xf32>
    %26 = vector.broadcast %25 : vector<1x32xf32> to vector<16x32xf32>
    %27 = arith.mulf %1, %26 : vector<16x32xf32>
    %cst_18 = arith.constant dense<0.000000e+00> : vector<16xf32>
    %28 = vector.multi_reduction <add>, %27, %cst_18 [1] : vector<16x32xf32> to vector<16xf32>
    %29 = vector.shape_cast %28 : vector<16xf32> to vector<16x1xf32>
    %30 = arith.addf %24, %29 : vector<16x1xf32>
    %31 = arith.negf %30 : vector<16x1xf32>
    %32 = math.exp %31 : vector<16x1xf32>
    %cst_19 = arith.constant 1.000000e+00 : f32
    %33 = vector.broadcast %cst_19 : f32 to vector<16x1xf32>
    %34 = arith.addf %33, %32 : vector<16x1xf32>
    %35 = arith.divf %33, %34 : vector<16x1xf32>
    %36 = vector.broadcast %35 : vector<16x1xf32> to vector<16x32xf32>
    %37 = arith.mulf %36, %15 : vector<16x32xf32>
    %cst_20 = arith.constant 1.000000e+00 : f32
    %38 = vector.broadcast %cst_20 : f32 to vector<16x1xf32>
    %39 = arith.subf %38, %35 : vector<16x1xf32>
    %40 = vector.broadcast %39 : vector<16x1xf32> to vector<16x32xf32>
    %41 = arith.mulf %40, %19 : vector<16x32xf32>
    %42 = arith.addf %37, %41 : vector<16x32xf32>
    %c0_21 = arith.constant 0 : index
    %c0_22 = arith.constant 0 : index
    %43 = vector.load %arg8[%c0_21, %c0_22] : memref<16x32xf32, #tpu.memory_space<vmem>>, vector<16x32xf32>
    tpu.vector_store %arg8[%c0_21, %c0_22], %42 {strides = array<i32>} : memref<16x32xf32, #tpu.memory_space<vmem>>, vector<16x32xf32>,
    return
  }
  func.func @transform_0(%arg0: i32) -> (i32, i32) {
    %c0_i32 = arith.constant 0 : i32
    %c0_i32_0 = arith.constant 0 : i32
    return %arg0, %c0_i32 : i32, i32
  }
  func.func @transform_1(%arg0: i32) -> (i32, i32) {
    %c0_i32 = arith.constant 0 : i32
    %c0_i32_0 = arith.constant 0 : i32
    return %arg0, %c0_i32 : i32, i32
  }
  func.func @transform_2(%arg0: i32) -> (i32, i32) {
    %c0_i32 = arith.constant 0 : i32
    %c0_i32_0 = arith.constant 0 : i32
    %c0_i32_1 = arith.constant 0 : i32
    return %c0_i32, %c0_i32_0 : i32, i32
  }
  func.func @transform_3(%arg0: i32) -> (i32, i32) {
    %c0_i32 = arith.constant 0 : i32
    %c0_i32_0 = arith.constant 0 : i32
    %c0_i32_1 = arith.constant 0 : i32
    return %c0_i32, %c0_i32_0 : i32, i32
  }
  func.func @transform_4(%arg0: i32) -> (i32, i32) {
    %c0_i32 = arith.constant 0 : i32
    %c0_i32_0 = arith.constant 0 : i32
    %c0_i32_1 = arith.constant 0 : i32
    return %c0_i32, %c0_i32_0 : i32, i32
  }
  func.func @transform_5(%arg0: i32) -> (i32, i32) {
    %c0_i32 = arith.constant 0 : i32
    %c0_i32_0 = arith.constant 0 : i32
    %c0_i32_1 = arith.constant 0 : i32
    return %c0_i32, %c0_i32_0 : i32, i32
  }
  func.func @transform_6(%arg0: i32) -> (i32, i32) {
    %c0_i32 = arith.constant 0 : i32
    %c0_i32_0 = arith.constant 0 : i32
    %c0_i32_1 = arith.constant 0 : i32
    return %c0_i32, %c0_i32_0 : i32, i32
  }
  func.func @transform_7(%arg0: i32) -> (i32, i32) {
    %c0_i32 = arith.constant 0 : i32
    %c0_i32_0 = arith.constant 0 : i32
    return %arg0, %c0_i32 : i32, i32
  }
}

</mosaic_0001>

<llo_original>
// kernel: tpu_custom_call.1
$region0: #{tpu_custom_call.1}
  #allocation0 [shape = 'u32[]', space=smem, size = 0x4, offset = 0x4, fixed_abs, tag = 'smem constant byte address 0x4 - core index']
  #allocation1 [shape = 'u32[144,128]{1,0:T(1,128)}', space=vmem, size = 0x12000, scoped, tag = 'internal scratch']
  %s0 = inlined_call_operand.hbm [shape: f32[16,32], index: 0, kind: input, shape index: {}]
  %s1 = inlined_call_operand.hbm [shape: f32[16,32], index: 1, kind: input, shape index: {}]
  %s2 = inlined_call_operand.hbm [shape: f32[32,32], index: 2, kind: input, shape index: {}]
  %s3 = inlined_call_operand.hbm [shape: f32[32,32], index: 3, kind: input, shape index: {}]
  %s4 = inlined_call_operand.vmem [shape: f32[1,32], index: 4, kind: input, shape index: {}]
  %s5 = inlined_call_operand.vmem [shape: f32[1,32], index: 5, kind: input, shape index: {}]
  %s6 = inlined_call_operand.vmem [shape: f32[4,32], index: 6, kind: input, shape index: {}]
  %s7 = inlined_call_operand.hbm [shape: f32[16,32], index: 7, kind: output, shape index: {}]
  %s8 = sld [smem:[#allocation0]]
  $region54: #{tpu_custom_call.1} parent=0
    _
  %s10 = ssub.s32 1, %s8
  %s11 = scalar_select 0, %s10, %s8
  $region1: #{tpu_custom_call.1} parent=0
    #allocation2 [shape = 'u8[8192]{0}', space=vmem, size = 0x2000, scoped, tag = 'input window, operand 0, single buffered']
    #allocation3 [shape = 's32[1]{0}', space=sflag, size = 0x4, scoped, tag = 'scoped memory for tpu_custom_call.1']
    #allocation4 [shape = 's32[1]{0}', space=sflag, size = 0x4, scoped, tag = 'scoped memory for tpu_custom_call.1']
    #allocation5 [shape = 'u8[8192]{0}', space=vmem, size = 0x2000, scoped, tag = 'input window, operand 1, single buffered']
    #allocation6 [shape = 's32[1]{0}', space=sflag, size = 0x4, scoped, tag = 'scoped memory for tpu_custom_call.1']
    #allocation7 [shape = 'u8[16384]{0}', space=vmem, size = 0x4000, scoped, tag = 'input window, operand 2, single buffered']
    #allocation8 [shape = 'u8[16384]{0}', space=vmem, size = 0x4000, scoped, tag = 'input window, operand 3, single buffered']
    #allocation9 [shape = 's32[1]{0}', space=sflag, size = 0x4, scoped, tag = 'scoped memory for tpu_custom_call.1']
    #allocation10 [shape = 'u8[8192]{0}', space=vmem, size = 0x2000, scoped, tag = 'output window, operand 0, single buffered']
    %12 = vsyncpa [#allocation3], 0
    %13 = vsyncpa [#allocation6], 0
    %14 = vsyncpa [#allocation9], 0
    %15 = vsyncpa [#allocation4], 0
    // Predicated region
    $region2: #{tpu_custom_call.1} parent=1 // pred_check
      _
    $region3: #{tpu_custom_call.1} parent=1 // pred_check_branch
      %17 = sbr.rel (0) target = $region5
    $region4: #{tpu_custom_call.1} parent=1 // pred_region
      %s19 = ssub.s32 256, 256
      %20 = vsyncadd [#allocation3], %s19
      %s21 = sshll.u32 [#allocation2], 4
      %s22 = int_to_ptr.vmem [resolvable:$true] %s21
      %27 = dma.hbm_to_vmem [thread:$0]  %s0, 256, %s22, [#allocation3], 128, 128, 8
    $region5: #{tpu_custom_call.1} parent=1 // pred_fallthru
      _
    // Predicated region
    $region6: #{tpu_custom_call.1} parent=1 // pred_check
      _
    $region7: #{tpu_custom_call.1} parent=1 // pred_check_branch
      %29 = sbr.rel (0) target = $region9
    $region8: #{tpu_custom_call.1} parent=1 // pred_region
      %s31 = ssub.s32 256, 256
      %32 = vsyncadd [#allocation6], %s31
      %s33 = sshll.u32 [#allocation5], 4
      %s34 = int_to_ptr.vmem [resolvable:$true] %s33
      %39 = dma.hbm_to_vmem [thread:$0]  %s1, 256, %s34, [#allocation6], 128, 128, 8
    $region9: #{tpu_custom_call.1} parent=1 // pred_fallthru
      _
    // Predicated region
    $region10: #{tpu_custom_call.1} parent=1 // pred_check
      _
    $region11: #{tpu_custom_call.1} parent=1 // pred_check_branch
      %41 = sbr.rel (0) target = $region13
    $region12: #{tpu_custom_call.1} parent=1 // pred_region
      %s43 = ssub.s32 512, 512
      %44 = vsyncadd [#allocation6], %s43
      %s45 = sshll.u32 [#allocation7], 4
      %s46 = int_to_ptr.vmem [resolvable:$true] %s45
      %51 = dma.hbm_to_vmem [thread:$0]  %s2, 512, %s46, [#allocation6], 128, 128, 8
    $region13: #{tpu_custom_call.1} parent=1 // pred_fallthru
      _
    // Predicated region
    $region14: #{tpu_custom_call.1} parent=1 // pred_check
      _
    $region15: #{tpu_custom_call.1} parent=1 // pred_check_branch
      %53 = sbr.rel (0) target = $region17
    $region16: #{tpu_custom_call.1} parent=1 // pred_region
      %s55 = ssub.s32 512, 512
      %56 = vsyncadd [#allocation9], %s55
      %s57 = sshll.u32 [#allocation8], 4
      %s58 = int_to_ptr.vmem [resolvable:$true] %s57
      %63 = dma.hbm_to_vmem [thread:$0]  %s3, 512, %s58, [#allocation9], 128, 128, 8
    $region17: #{tpu_custom_call.1} parent=1 // pred_fallthru
      _
    // Predicated region
    $region18: #{tpu_custom_call.1} parent=1 // pred_check
      _
    $region19: #{tpu_custom_call.1} parent=1 // pred_check_branch
      %65 = sbr.rel (0) target = $region21
    $region20: #{tpu_custom_call.1} parent=1 // pred_region
      _
    $region21: #{tpu_custom_call.1} parent=1 // pred_fallthru
      _
    // Predicated region
    $region22: #{tpu_custom_call.1} parent=1 // pred_check
      _
    $region23: #{tpu_custom_call.1} parent=1 // pred_check_branch
      %67 = sbr.rel (0) target = $region25
    $region24: #{tpu_custom_call.1} parent=1 // pred_region
      _
    $region25: #{tpu_custom_call.1} parent=1 // pred_fallthru
      _
    // Predicated region
    $region26: #{tpu_custom_call.1} parent=1 // pred_check
      _
    $region27: #{tpu_custom_call.1} parent=1 // pred_check_branch
      %69 = sbr.rel (0) target = $region29
    $region28: #{tpu_custom_call.1} parent=1 // pred_region
      _
    $region29: #{tpu_custom_call.1} parent=1 // pred_fallthru
      _
    // Predicated region
    $region30: #{tpu_custom_call.1} parent=1 // pred_check
      _
    $region31: #{tpu_custom_call.1} parent=1 // pred_check_branch
      %71 = sbr.rel (0) target = $region33
    $region32: #{tpu_custom_call.1} parent=1 // pred_region
      %72 = dma.done [#allocation3], 256
    $region33: #{tpu_custom_call.1} parent=1 // pred_fallthru
      _
    // Predicated region
    $region34: #{tpu_custom_call.1} parent=1 // pred_check
      _
    $region35: #{tpu_custom_call.1} parent=1 // pred_check_branch
      %74 = sbr.rel (0) target = $region37
    $region36: #{tpu_custom_call.1} parent=1 // pred_region
      %75 = dma.done [#allocation6], 256
    $region37: #{tpu_custom_call.1} parent=1 // pred_fallthru
      _
    // Predicated region
    $region38: #{tpu_custom_call.1} parent=1 // pred_check
      _
    $region39: #{tpu_custom_call.1} parent=1 // pred_check_branch
      %77 = sbr.rel (0) target = $region41
    $region40: #{tpu_custom_call.1} parent=1 // pred_region
      %78 = dma.done [#allocation6], 512
    $region41: #{tpu_custom_call.1} parent=1 // pred_fallthru
      _
    // Predicated region
    $region42: #{tpu_custom_call.1} parent=1 // pred_check
      _
    $region43: #{tpu_custom_call.1} parent=1 // pred_check_branch
      %80 = sbr.rel (0) target = $region45
    $region44: #{tpu_custom_call.1} parent=1 // pred_region
      %81 = dma.done [#allocation9], 512
    $region45: #{tpu_custom_call.1} parent=1 // pred_fallthru
      _
    %v82 = vld [vmem:[#allocation2] sm:$0xff]
    %v83 = vld [vmem:[#allocation2 + $0x8] sm:$0xff]
    %v84 = vld [vmem:[#allocation5] sm:$0xff]
    %v85 = vld [vmem:[#allocation5 + $0x8] sm:$0xff]
    %v86 = vld [vmem:[#allocation7] sm:$0xff]
    %v87 = vld [vmem:[#allocation7 + $0x8] sm:$0xff]
    %v88 = vld [vmem:[#allocation7 + $0x10] sm:$0xff]
    %v89 = vld [vmem:[#allocation7 + $0x18] sm:$0xff]
    %vm90 = vcmask 261120
    %v92 = vsel %vm90, %v82, 0
    %v95 = vsel %vm90, %v83, 0
    %97 = vmatprep.subr.mxu0 0.0
    %98 = vmatpush1.msra.mxu0 %v86
    %99 = vmatprep.subr.mxu0 0.0
    %100 = vmatpush1.msra.mxu0 %v87
    %101 = vmatprep.subr.mxu0 0.0
    %102 = vmatpush1.msra.mxu0 %v88
    %103 = vmatprep.subr.mxu0 0.0
    %104 = vmatpush1.msra.mxu0 %v89
    %105 = vmatprep.subr.mxu0 0.0
    %106 = vmatpush1.msra.mxu0 0.0
    %107 = vmatprep.subr.mxu0 0.0
    %108 = vmatpush1.msra.mxu0 0.0
    %109 = vmatprep.subr.mxu0 0.0
    %110 = vmatpush1.msra.mxu0 0.0
    %111 = vmatprep.subr.mxu0 0.0
    %112 = vmatpush1.msra.mxu0 0.0
    %113 = vmatprep.subr.mxu0 0.0
    %114 = vmatpush1.msra.mxu0 0.0
    %115 = vmatprep.subr.mxu0 0.0
    %116 = vmatpush1.msra.mxu0 0.0
    %117 = vmatprep.subr.mxu0 0.0
    %118 = vmatpush1.msra.mxu0 0.0
    %119 = vmatprep.subr.mxu0 0.0
    %120 = vmatpush1.msra.mxu0 0.0
    %121 = vmatprep.subr.mxu0 0.0
    %122 = vmatpush1.msra.mxu0 0.0
    %123 = vmatprep.subr.mxu0 0.0
    %124 = vmatpush1.msra.mxu0 0.0
    %125 = vmatprep.subr.mxu0 0.0
    %126 = vmatpush1.msra.mxu0 0.0
    %127 = vmatprep.subr.mxu0 0.0
    %128 = vmatpush1.msra.mxu0 0.0
    %129 = vmatprep.subr.mxu0 0.0
    %130 = vmatpush1.msra.mxu0 0.0
    %131 = vmatprep.subr.mxu0 0.0
    %132 = vmatpush1.msra.mxu0 0.0
    %133 = vmatprep.subr.mxu0 0.0
    %134 = vmatpush1.msra.mxu0 0.0
    %135 = vmatprep.subr.mxu0 0.0
    %136 = vmatpush1.msra.mxu0 0.0
    %137 = vmatprep.subr.mxu0 0.0
    %138 = vmatpush1.msra.mxu0 0.0
    %139 = vmatprep.subr.mxu0 0.0
    %140 = vmatpush1.msra.mxu0 0.0
    %141 = vmatprep.subr.mxu0 0.0
    %142 = vmatpush1.msra.mxu0 0.0
    %143 = vmatprep.subr.mxu0 0.0
    %144 = vmatpush1.msra.mxu0 0.0
    %145 = vmatprep.subr.mxu0 0.0
    %146 = vmatpush1.msra.mxu0 0.0
    %147 = vmatprep.subr.mxu0 0.0
    %148 = vmatpush1.msra.mxu0 0.0
    %149 = vmatprep.subr.mxu0 0.0
    %150 = vmatpush1.msra.mxu0 0.0
    %151 = vmatprep.subr.mxu0 0.0
    %152 = vmatpush1.msra.mxu0 0.0
    %153 = vmatprep.subr.mxu0 0.0
    %154 = vmatpush1.msra.mxu0 0.0
    %155 = vmatprep.subr.mxu0 0.0
    %156 = vmatpush1.msra.mxu0 0.0
    %157 = vmatprep.subr.mxu0 0.0
    %158 = vmatpush1.msra.mxu0 0.0
    %159 = vmatprep.subr.mxu0 0.0
    %160 = vmatpush1.msra.mxu0 0.0
    %161 = vmatprep.mubr.f32.mxu0 0.0
    %162 = vmatmul.mubr.f32.gmra.mrb[0].mxu0 %v92
    %v163 = vpop.f32.mrb[0].mxu0
    %v164 = vadd.f32 0.0, %v163
    %v165 = vpop.f32.mrb[0].mxu0
    %166 = vmatprep.mubr.f32.mxu0 0.0
    %167 = vmatmul.mubr.f32.gmra.mrb[0].mxu0 %v95
    %v168 = vpop.f32.mrb[0].mxu0
    %v169 = vadd.f32 0.0, %v168
    %v170 = vpop.f32.mrb[0].mxu0
    %171 = vdwg.mxu0
    %v172 = vtanh.pop %v164
    %v173 = vtanh.pop %v169
    %v174 = vld [vmem:[#allocation8] sm:$0xff]
    %v175 = vld [vmem:[#allocation8 + $0x8] sm:$0xff]
    %v176 = vld [vmem:[#allocation8 + $0x10] sm:$0xff]
    %v177 = vld [vmem:[#allocation8 + $0x18] sm:$0xff]
    %v179 = vsel %vm90, %v84, 0
    %v182 = vsel %vm90, %v85, 0
    %184 = vmatprep.subr.mxu0 0.0
    %185 = vmatpush1.msra.mxu0 %v174
    %186 = vmatprep.subr.mxu0 0.0
    %187 = vmatpush1.msra.mxu0 %v175
    %188 = vmatprep.subr.mxu0 0.0
    %189 = vmatpush1.msra.mxu0 %v176
    %190 = vmatprep.subr.mxu0 0.0
    %191 = vmatpush1.msra.mxu0 %v177
    %192 = vmatprep.subr.mxu0 0.0
    %193 = vmatpush1.msra.mxu0 0.0
    %194 = vmatprep.subr.mxu0 0.0
    %195 = vmatpush1.msra.mxu0 0.0
    %196 = vmatprep.subr.mxu0 0.0
    %197 = vmatpush1.msra.mxu0 0.0
    %198 = vmatprep.subr.mxu0 0.0
    %199 = vmatpush1.msra.mxu0 0.0
    %200 = vmatprep.subr.mxu0 0.0
    %201 = vmatpush1.msra.mxu0 0.0
    %202 = vmatprep.subr.mxu0 0.0
    %203 = vmatpush1.msra.mxu0 0.0
    %204 = vmatprep.subr.mxu0 0.0
    %205 = vmatpush1.msra.mxu0 0.0
    %206 = vmatprep.subr.mxu0 0.0
    %207 = vmatpush1.msra.mxu0 0.0
    %208 = vmatprep.subr.mxu0 0.0
    %209 = vmatpush1.msra.mxu0 0.0
    %210 = vmatprep.subr.mxu0 0.0
    %211 = vmatpush1.msra.mxu0 0.0
    %212 = vmatprep.subr.mxu0 0.0
    %213 = vmatpush1.msra.mxu0 0.0
    %214 = vmatprep.subr.mxu0 0.0
    %215 = vmatpush1.msra.mxu0 0.0
    %216 = vmatprep.subr.mxu0 0.0
    %217 = vmatpush1.msra.mxu0 0.0
    %218 = vmatprep.subr.mxu0 0.0
    %219 = vmatpush1.msra.mxu0 0.0
    %220 = vmatprep.subr.mxu0 0.0
    %221 = vmatpush1.msra.mxu0 0.0
    %222 = vmatprep.subr.mxu0 0.0
    %223 = vmatpush1.msra.mxu0 0.0
    %224 = vmatprep.subr.mxu0 0.0
    %225 = vmatpush1.msra.mxu0 0.0
    %226 = vmatprep.subr.mxu0 0.0
    %227 = vmatpush1.msra.mxu0 0.0
    %228 = vmatprep.subr.mxu0 0.0
    %229 = vmatpush1.msra.mxu0 0.0
    %230 = vmatprep.subr.mxu0 0.0
    %231 = vmatpush1.msra.mxu0 0.0
    %232 = vmatprep.subr.mxu0 0.0
    %233 = vmatpush1.msra.mxu0 0.0
    %234 = vmatprep.subr.mxu0 0.0
    %235 = vmatpush1.msra.mxu0 0.0
    %236 = vmatprep.subr.mxu0 0.0
    %237 = vmatpush1.msra.mxu0 0.0
    %238 = vmatprep.subr.mxu0 0.0
    %239 = vmatpush1.msra.mxu0 0.0
    %240 = vmatprep.subr.mxu0 0.0
    %241 = vmatpush1.msra.mxu0 0.0
    %242 = vmatprep.subr.mxu0 0.0
    %243 = vmatpush1.msra.mxu0 0.0
    %244 = vmatprep.subr.mxu0 0.0
    %245 = vmatpush1.msra.mxu0 0.0
    %246 = vmatprep.subr.mxu0 0.0
    %247 = vmatpush1.msra.mxu0 0.0
    %248 = vmatprep.mubr.f32.mxu0 0.0
    %249 = vmatmul.mubr.f32.gmra.mrb[0].mxu0 %v179
    %v250 = vpop.f32.mrb[0].mxu0
    %v251 = vadd.f32 0.0, %v250
    %v252 = vpop.f32.mrb[0].mxu0
    %253 = vmatprep.mubr.f32.mxu0 0.0
    %254 = vmatmul.mubr.f32.gmra.mrb[0].mxu0 %v182
    %v255 = vpop.f32.mrb[0].mxu0
    %v256 = vadd.f32 0.0, %v255
    %v257 = vpop.f32.mrb[0].mxu0
    %258 = vdwg.mxu0
    %v259 = vtanh.pop %v251
    %v260 = vtanh.pop %v256
    %v261 = vld [vmem:[%s6] sm:$0x1]
    %v262 = vld [vmem:[%s6 + $0x1] sm:$0x1]
    %v263 = vld [vmem:[%s6 + $0x2] sm:$0x1]
    %v264 = vld [vmem:[%s6 + $0x3] sm:$0x1]
    %v265 = vlaneseq
    %v266 = vshrl.u32 %v265, 7
    %v267 = vsub.s32 0, %v266
    %v268 = vrot.slane %v261, %v267
    %v269 = vmul.f32 %v268, %v172
    %v270 = vmul.f32 %v268, %v173
    %v271 = vlaneseq
    %v272 = vshrl.u32 %v271, 7
    %v273 = vsub.s32 0, %v272
    %v274 = vrot.slane %v262, %v273
    %v275 = vadd.f32 %v269, %v274
    %v276 = vadd.f32 %v270, %v274
    %v277 = vlaneseq
    %v278 = vshrl.u32 %v277, 7
    %v279 = vsub.s32 0, %v278
    %v280 = vrot.slane %v263, %v279
    %v281 = vmul.f32 %v280, %v259
    %v282 = vmul.f32 %v280, %v260
    %v283 = vlaneseq
    %v284 = vshrl.u32 %v283, 7
    %v285 = vsub.s32 0, %v284
    %v286 = vrot.slane %v264, %v285
    %v287 = vadd.f32 %v281, %v286
    %v288 = vadd.f32 %v282, %v286
    %v289 = vld [vmem:[%s4] sm:$0x1]
    %v291 = vlaneseq
    %v292 = vshrl.u32 %v291, 7
    %v293 = vsub.s32 0, %v292
    %v294 = vrot.slane %v289, %v293
    %v296 = vmul.f32 %v82, %v294
    %v297 = vmul.f32 %v83, %v294
    %v298 = vsel %vm90, %v296, 0.0
    %299 = vadd.xlane.f32.xlu0 %v298
    %v300 = vpop.xlane.xlu0 %299
    %v301 = vsel %vm90, %v297, 0.0
    %302 = vadd.xlane.f32.xlu0 %v301
    %v303 = vpop.xlane.xlu0 %302
    %v304 = vld [vmem:[%s5] sm:$0x1]
    %v306 = vlaneseq
    %v307 = vshrl.u32 %v306, 7
    %v308 = vsub.s32 0, %v307
    %v309 = vrot.slane %v304, %v308
    %v311 = vmul.f32 %v84, %v309
    %v312 = vmul.f32 %v85, %v309
    %v313 = vsel %vm90, %v311, 0.0
    %314 = vadd.xlane.f32.xlu0 %v313
    %v315 = vpop.xlane.xlu0 %314
    %v316 = vsel %vm90, %v312, 0.0
    %317 = vadd.xlane.f32.xlu0 %v316
    %v318 = vpop.xlane.xlu0 %317
    %v319 = vadd.f32 %v300, %v315
    %v320 = vadd.f32 %v303, %v318
    %v321 = vxor.u32 %v319, 2147483648
    %v322 = vxor.u32 %v320, 2147483648
    %v323 = vmul.f32 %v321, 1.442695
    %v324 = vpow.pop %v323
    %v325 = vmul.f32 %v322, 1.442695
    %v326 = vpow.pop %v325
    %v327 = vadd.f32 %v324, 1.0
    %v328 = vadd.f32 %v326, 1.0
    %v329 = vrcp.pop %v327
    %v330 = vmul.f32 1.0, %v329
    %v331 = vrcp.pop %v328
    %v332 = vmul.f32 1.0, %v331
    %v333 = vmul.f32 %v330, %v275
    %v334 = vmul.f32 %v332, %v276
    %v335 = vsub.f32 1.0, %v330
    %v336 = vsub.f32 1.0, %v332
    %v337 = vmul.f32 %v335, %v287
    %v338 = vmul.f32 %v336, %v288
    %v339 = vadd.f32 %v333, %v337
    %v340 = vadd.f32 %v334, %v338
    %341 = vst.msk [vmem:[#allocation10] sm:$0xff] %vm90, %v339
    %342 = vst.msk [vmem:[#allocation10 + $0x8] sm:$0xff] %vm90, %v340
    // Predicated region
    $region46: #{tpu_custom_call.1} parent=1 // pred_check
      _
    $region47: #{tpu_custom_call.1} parent=1 // pred_check_branch
      %344 = sbr.rel (0) target = $region49
    $region48: #{tpu_custom_call.1} parent=1 // pred_region
      %s346 = ssub.s32 256, 256
      %347 = vsyncadd [#allocation4], %s346
      %s348 = sshll.u32 [#allocation10], 4
      %s349 = int_to_ptr.vmem [resolvable:$true] %s348
      %354 = dma.vmem_to_hbm [thread:$0]  %s349, 256, %s7, [#allocation4], 128, 128, 8
    $region49: #{tpu_custom_call.1} parent=1 // pred_fallthru
      _
    // Predicated region
    $region50: #{tpu_custom_call.1} parent=1 // pred_check
      _
    $region51: #{tpu_custom_call.1} parent=1 // pred_check_branch
      %356 = sbr.rel (0) target = $region53
    $region52: #{tpu_custom_call.1} parent=1 // pred_region
      %357 = dma.done [#allocation4], 256
    $region53: #{tpu_custom_call.1} parent=1 // pred_fallthru
      _
    %358 = vsyncpa [#allocation3], 1
    %359 = vsyncpa [#allocation6], 1
    %360 = vsyncpa [#allocation9], 1
    %361 = vsyncpa [#allocation4], 1

</llo_original>
